<compile_context>
chip_gen: v6e
topology: v6e:2x2x1
jax: 0.10.0
libtpu: 0.0.40
codegen_flags: <defaults>
</compile_context>

<pallas_src>
import jax
import jax.numpy as jnp
from jax.experimental import pallas as pl
from jax.experimental.pallas import tpu as pltpu


def rnn_kernel(x_ref, params_ref, w_hh_ref, out_ref):
    """Single-layer tanh RNN over the full sequence + final linear head.

    x_ref      : (T*Bp, Ip)   time-major, batch-flattened, zero-padded input
    params_ref : (Ip+3, Hp)   packed [w_ih^T ; b_ih+b_hh ; fc_row ; fc_bias]
    w_hh_ref   : (Hp, Hp)     hidden->hidden weight (pre-transposed, padded)
    out_ref    : (Bp, 1)      fc applied to the last hidden state
    """
    TB, Ip = x_ref.shape
    Bp = out_ref.shape[0]
    T = TB // Bp

    # Unpack the parameter slab (static sublane slices -> zero runtime cost).
    w_ih = params_ref[0:Ip, :]                 # (Ip, Hp) input->hidden weight
    b = params_ref[Ip:Ip + 1, :]               # (1, Hp)  combined bias
    w_fc = params_ref[Ip + 1:Ip + 2, :]        # (1, Hp)  fc weight row
    b_fc = params_ref[Ip + 2:Ip + 3, :]        # (1, Hp)  fc bias (broadcast)

    # Hoisted input projection: one MXU matmul covering every timestep, off
    # the serial critical path.
    xw = (jnp.dot(x_ref[...], w_ih, preferred_element_type=jnp.float32)
          + b)                                 # (T*Bp, Hp)

    # Loop-invariant recurrent weight loaded once; closed over by the loop.
    w_hh = w_hh_ref[...]                       # (Hp, Hp)

    # t = 0: h_prev = 0 (PyTorch default) -> recurrent matmul skipped.
    h = jnp.tanh(xw[0:Bp, :])                  # (Bp, Hp)

    # Fully unrolled recurrence (T is compile-time fixed): exactly one matmul
    # per step on the chain + one EUP tanh; hidden state stays in vregs.
    for t in range(1, T):
        h = jnp.tanh(xw[t * Bp:(t + 1) * Bp, :]
                     + jnp.dot(h, w_hh, preferred_element_type=jnp.float32))

    # fc head: VPU multiply + lane reduction (no padded MXU matmul).  The
    # single narrow (Bp, 1) store is a one-time, negligible masked store.
    out_ref[...] = (jnp.sum(h * w_fc, axis=-1, keepdims=True)
                    + b_fc[:, :1])


def _round_up(x, m):
    return ((x + m - 1) // m) * m


def prepare_params(w_ih, w_hh, b_ih, b_hh, w_fc, b_fc):
    """Pad / transpose / pack the parameters ONCE.  Cache the result and pass
    it to `rnn_forward` on every call (the padding never recomputes)."""
    H, I = w_ih.shape
    Ip = _round_up(I, 8)
    Hp = _round_up(H, 128)
    f32 = jnp.float32

    w_ih_p = jnp.zeros((Ip, Hp), f32).at[:I, :H].set(w_ih.T.astype(f32))
    b_row = jnp.zeros((1, Hp), f32).at[:, :H].set(
        (b_ih + b_hh).reshape(1, H).astype(f32))
    w_fc_row = jnp.zeros((1, Hp), f32).at[:, :H].set(
        w_fc.reshape(1, H).astype(f32))
    b_fc_row = jnp.full((1, Hp), b_fc.reshape(-1)[0].astype(f32), f32)

    params = jnp.concatenate([w_ih_p, b_row, w_fc_row, b_fc_row], axis=0)
    w_hh_p = jnp.zeros((Hp, Hp), f32).at[:H, :H].set(w_hh.T.astype(f32))
    return params, w_hh_p


@jax.jit
def rnn_forward(x_btI, params, w_hh_p):
    """x_btI: (B, T, I) batch-first like the PyTorch module. Returns (B, 1)."""
    B, T, I = x_btI.shape
    Ip = params.shape[0] - 3
    Bp = _round_up(B, 8)
    f32 = jnp.float32

    # Per-call activation padding only: time-major, zero-padded, flattened.
    x_tbI = jnp.transpose(x_btI, (1, 0, 2)).astype(f32)            # (T, B, I)
    x_p = jnp.pad(x_tbI, ((0, 0), (0, Bp - B), (0, Ip - I)))
    x_p = x_p.reshape(T * Bp, Ip)

    vmem = pl.BlockSpec(memory_space=pltpu.MemorySpace.VMEM)
    out_p = pl.pallas_call(
        rnn_kernel,
        out_shape=jax.ShapeDtypeStruct((Bp, 1), f32),
        in_specs=[vmem, vmem, vmem],
        out_specs=vmem,
    )(x_p, params, w_hh_p)

    return out_p[:B, :]


def rnn_reference(x_btI, w_ih, w_hh, b_ih, b_hh, w_fc, b_fc):
    """Pure-JAX reference mirroring nn.RNN(batch_first=True) + fc."""
    B, T, I = x_btI.shape
    H = w_hh.shape[0]
    h = jnp.zeros((B, H), jnp.float32)
    for t in range(T):
        h = jnp.tanh(x_btI[:, t, :] @ w_ih.T + b_ih + h @ w_hh.T + b_hh)
    return h @ w_fc.T + b_fc


if __name__ == "__main__":
    B, T, I, H, O = 2, 8, 7, 32, 1

    key = jax.random.PRNGKey(0)
    kx, k1, k2, k3, k4, k5, k6 = jax.random.split(key, 7)

    # Deterministic synthetic parameters (uniform(-1/sqrt(H), 1/sqrt(H)),
    # matching PyTorch's default init distribution, but seeded here).
    s = 1.0 / jnp.sqrt(jnp.float32(H))
    x = jax.random.normal(kx, (B, T, I), jnp.float32)
    w_ih = jax.random.uniform(k1, (H, I), jnp.float32, -s, s)
    w_hh = jax.random.uniform(k2, (H, H), jnp.float32, -s, s)
    b_ih = jax.random.uniform(k3, (H,), jnp.float32, -s, s)
    b_hh = jax.random.uniform(k4, (H,), jnp.float32, -s, s)
    w_fc = jax.random.uniform(k5, (O, H), jnp.float32, -s, s)
    b_fc = jax.random.uniform(k6, (O,), jnp.float32, -s, s)

    # Padded / packed parameters computed once (cache these across calls).
    params, w_hh_p = jax.block_until_ready(
        prepare_params(w_ih, w_hh, b_ih, b_hh, w_fc, b_fc))

    out = rnn_forward(x, params, w_hh_p)
    out = jax.block_until_ready(out)

    ref = rnn_reference(x, w_ih, w_hh, b_ih, b_hh, w_fc, b_fc)
    assert out.shape == (B, O)
    assert jnp.allclose(out, ref, rtol=1e-5, atol=1e-5)

    print("KERNEL_OK")
</pallas_src>

<mosaic_0001>
module attributes {stable_mosaic.version = 11 : i64} {
  func.func @rnn_kernel(%arg0: memref<64x8xf32, #tpu.memory_space<vmem>>, %arg1: memref<11x128xf32, #tpu.memory_space<vmem>>, %arg2: memref<128x128xf32, #tpu.memory_space<vmem>>, %arg3: memref<8x1xf32, #tpu.memory_space<vmem>>) attributes {dimension_semantics = [], scalar_prefetch = 0 : i64, scratch_operands = 0 : i64, tpu.core_type = #tpu.core_type<tc>} {
    %c0 = arith.constant 0 : index
    %c0_0 = arith.constant 0 : index
    %0 = vector.load %arg1[%c0, %c0_0] : memref<11x128xf32, #tpu.memory_space<vmem>>, vector<8x128xf32>
    %c8 = arith.constant 8 : index
    %c0_1 = arith.constant 0 : index
    %1 = vector.load %arg1[%c8, %c0_1] : memref<11x128xf32, #tpu.memory_space<vmem>>, vector<1x128xf32>
    %c9 = arith.constant 9 : index
    %c0_2 = arith.constant 0 : index
    %2 = vector.load %arg1[%c9, %c0_2] : memref<11x128xf32, #tpu.memory_space<vmem>>, vector<1x128xf32>
    %c10 = arith.constant 10 : index
    %c0_3 = arith.constant 0 : index
    %3 = vector.load %arg1[%c10, %c0_3] : memref<11x128xf32, #tpu.memory_space<vmem>>, vector<1x128xf32>
    %c0_4 = arith.constant 0 : index
    %c0_5 = arith.constant 0 : index
    %4 = vector.load %arg0[%c0_4, %c0_5] : memref<64x8xf32, #tpu.memory_space<vmem>>, vector<64x8xf32>
    %cst = arith.constant dense<0.000000e+00> : vector<64x128xf32>
    %5 = tpu.matmul %4, %0, %cst {dimension_numbers = #tpu.dot_dimension_numbers<[1], [0], [0], [1], [0, 0, 1, 1], [], []>} : vector<64x8xf32>, vector<8x128xf32>, vector<64x128xf32> -> vector<64x128xf32>
    %6 = vector.broadcast %1 : vector<1x128xf32> to vector<64x128xf32>
    %7 = arith.addf %5, %6 : vector<64x128xf32>
    %c0_6 = arith.constant 0 : index
    %c0_7 = arith.constant 0 : index
    %8 = vector.load %arg2[%c0_6, %c0_7] : memref<128x128xf32, #tpu.memory_space<vmem>>, vector<128x128xf32>
    %9 = vector.extract_strided_slice %7 {offsets = [0, 0], sizes = [8, 128], strides = [1, 1]} : vector<64x128xf32> to vector<8x128xf32>
    %10 = math.tanh %9 : vector<8x128xf32>
    %11 = vector.extract_strided_slice %7 {offsets = [8, 0], sizes = [8, 128], strides = [1, 1]} : vector<64x128xf32> to vector<8x128xf32>
    %cst_8 = arith.constant dense<0.000000e+00> : vector<8x128xf32>
    %12 = tpu.matmul %10, %8, %cst_8 {dimension_numbers = #tpu.dot_dimension_numbers<[1], [0], [0], [1], [0, 0, 1, 1], [], []>} : vector<8x128xf32>, vector<128x128xf32>, vector<8x128xf32> -> vector<8x128xf32>
    %13 = arith.addf %11, %12 : vector<8x128xf32>
    %14 = math.tanh %13 : vector<8x128xf32>
    %15 = vector.extract_strided_slice %7 {offsets = [16, 0], sizes = [8, 128], strides = [1, 1]} : vector<64x128xf32> to vector<8x128xf32>
    %cst_9 = arith.constant dense<0.000000e+00> : vector<8x128xf32>
    %16 = tpu.matmul %14, %8, %cst_9 {dimension_numbers = #tpu.dot_dimension_numbers<[1], [0], [0], [1], [0, 0, 1, 1], [], []>} : vector<8x128xf32>, vector<128x128xf32>, vector<8x128xf32> -> vector<8x128xf32>
    %17 = arith.addf %15, %16 : vector<8x128xf32>
    %18 = math.tanh %17 : vector<8x128xf32>
    %19 = vector.extract_strided_slice %7 {offsets = [24, 0], sizes = [8, 128], strides = [1, 1]} : vector<64x128xf32> to vector<8x128xf32>
    %cst_10 = arith.constant dense<0.000000e+00> : vector<8x128xf32>
    %20 = tpu.matmul %18, %8, %cst_10 {dimension_numbers = #tpu.dot_dimension_numbers<[1], [0], [0], [1], [0, 0, 1, 1], [], []>} : vector<8x128xf32>, vector<128x128xf32>, vector<8x128xf32> -> vector<8x128xf32>
    %21 = arith.addf %19, %20 : vector<8x128xf32>
    %22 = math.tanh %21 : vector<8x128xf32>
    %23 = vector.extract_strided_slice %7 {offsets = [32, 0], sizes = [8, 128], strides = [1, 1]} : vector<64x128xf32> to vector<8x128xf32>
    %cst_11 = arith.constant dense<0.000000e+00> : vector<8x128xf32>
    %24 = tpu.matmul %22, %8, %cst_11 {dimension_numbers = #tpu.dot_dimension_numbers<[1], [0], [0], [1], [0, 0, 1, 1], [], []>} : vector<8x128xf32>, vector<128x128xf32>, vector<8x128xf32> -> vector<8x128xf32>
    %25 = arith.addf %23, %24 : vector<8x128xf32>
    %26 = math.tanh %25 : vector<8x128xf32>
    %27 = vector.extract_strided_slice %7 {offsets = [40, 0], sizes = [8, 128], strides = [1, 1]} : vector<64x128xf32> to vector<8x128xf32>
    %cst_12 = arith.constant dense<0.000000e+00> : vector<8x128xf32>
    %28 = tpu.matmul %26, %8, %cst_12 {dimension_numbers = #tpu.dot_dimension_numbers<[1], [0], [0], [1], [0, 0, 1, 1], [], []>} : vector<8x128xf32>, vector<128x128xf32>, vector<8x128xf32> -> vector<8x128xf32>
    %29 = arith.addf %27, %28 : vector<8x128xf32>
    %30 = math.tanh %29 : vector<8x128xf32>
    %31 = vector.extract_strided_slice %7 {offsets = [48, 0], sizes = [8, 128], strides = [1, 1]} : vector<64x128xf32> to vector<8x128xf32>
    %cst_13 = arith.constant dense<0.000000e+00> : vector<8x128xf32>
    %32 = tpu.matmul %30, %8, %cst_13 {dimension_numbers = #tpu.dot_dimension_numbers<[1], [0], [0], [1], [0, 0, 1, 1], [], []>} : vector<8x128xf32>, vector<128x128xf32>, vector<8x128xf32> -> vector<8x128xf32>
    %33 = arith.addf %31, %32 : vector<8x128xf32>
    %34 = math.tanh %33 : vector<8x128xf32>
    %35 = vector.extract_strided_slice %7 {offsets = [56, 0], sizes = [8, 128], strides = [1, 1]} : vector<64x128xf32> to vector<8x128xf32>
    %cst_14 = arith.constant dense<0.000000e+00> : vector<8x128xf32>
    %36 = tpu.matmul %34, %8, %cst_14 {dimension_numbers = #tpu.dot_dimension_numbers<[1], [0], [0], [1], [0, 0, 1, 1], [], []>} : vector<8x128xf32>, vector<128x128xf32>, vector<8x128xf32> -> vector<8x128xf32>
    %37 = arith.addf %35, %36 : vector<8x128xf32>
    %38 = math.tanh %37 : vector<8x128xf32>
    %39 = vector.broadcast %2 : vector<1x128xf32> to vector<8x128xf32>
    %40 = arith.mulf %38, %39 : vector<8x128xf32>
    %cst_15 = arith.constant dense<0.000000e+00> : vector<8xf32>
    %41 = vector.multi_reduction <add>, %40, %cst_15 [1] : vector<8x128xf32> to vector<8xf32>
    %42 = vector.shape_cast %41 : vector<8xf32> to vector<8x1xf32>
    %43 = vector.extract_strided_slice %3 {offsets = [0, 0], sizes = [1, 1], strides = [1, 1]} : vector<1x128xf32> to vector<1x1xf32>
    %44 = vector.broadcast %43 : vector<1x1xf32> to vector<8x1xf32>
    %45 = arith.addf %42, %44 : vector<8x1xf32>
    %c0_16 = arith.constant 0 : index
    %c0_17 = arith.constant 0 : index
    %46 = vector.load %arg3[%c0_16, %c0_17] : memref<8x1xf32, #tpu.memory_space<vmem>>, vector<8x1xf32>
    tpu.vector_store %arg3[%c0_16, %c0_17], %45 {strides = array<i32>} : memref<8x1xf32, #tpu.memory_space<vmem>>, vector<8x1xf32>,
    return
  }
}

</mosaic_0001>

<llo_original>
// kernel: rnn_forward.1
$region0: #{rnn_forward.1}
  #allocation0 [shape = 'u32[]', space=smem, size = 0x4, offset = 0x4, fixed_abs, tag = 'smem constant byte address 0x4 - core index']
  #allocation1 [shape = 'u32[144,128]{1,0:T(1,128)}', space=vmem, size = 0x12000, scoped, tag = 'internal scratch']
  %s0 = inlined_call_operand.vmem [shape: f32[64,8], index: 0, kind: input, shape index: {}]
  %s1 = inlined_call_operand.vmem [shape: f32[11,128], index: 1, kind: input, shape index: {}]
  %s2 = inlined_call_operand.hbm [shape: f32[128,128], index: 2, kind: input, shape index: {}]
  %s3 = inlined_call_operand.vmem [shape: f32[8,1], index: 3, kind: output, shape index: {}]
  %s4 = sld [smem:[#allocation0]]
  $region26: #{rnn_forward.1} parent=0
    _
  %s6 = ssub.s32 1, %s4
  %s7 = scalar_select 0, %s6, %s4
  $region1: #{rnn_forward.1} parent=0
    #allocation2 [shape = 'u8[65536]{0}', space=vmem, size = 0x10000, scoped, tag = 'input window, operand 2, single buffered']
    #allocation3 [shape = 's32[1]{0}', space=sflag, size = 0x4, scoped, tag = 'scoped memory for rnn_forward.1']
    %8 = vsyncpa [#allocation3], 0
    // Predicated region
    $region2: #{rnn_forward.1} parent=1 // pred_check
      _
    $region3: #{rnn_forward.1} parent=1 // pred_check_branch
      %10 = sbr.rel (0) target = $region5
    $region4: #{rnn_forward.1} parent=1 // pred_region
      _
    $region5: #{rnn_forward.1} parent=1 // pred_fallthru
      _
    // Predicated region
    $region6: #{rnn_forward.1} parent=1 // pred_check
      _
    $region7: #{rnn_forward.1} parent=1 // pred_check_branch
      %12 = sbr.rel (0) target = $region9
    $region8: #{rnn_forward.1} parent=1 // pred_region
      _
    $region9: #{rnn_forward.1} parent=1 // pred_fallthru
      _
    // Predicated region
    $region10: #{rnn_forward.1} parent=1 // pred_check
      _
    $region11: #{rnn_forward.1} parent=1 // pred_check_branch
      %14 = sbr.rel (0) target = $region13
    $region12: #{rnn_forward.1} parent=1 // pred_region
      %s16 = ssub.s32 2048, 2048
      %17 = vsyncadd [#allocation3], %s16
      %s18 = sshll.u32 [#allocation2], 4
      %s19 = int_to_ptr.vmem [resolvable:$true] %s18
      %24 = dma.hbm_to_vmem [thread:$0]  %s2, 2048, %s19, [#allocation3], 128, 128, 8
    $region13: #{rnn_forward.1} parent=1 // pred_fallthru
      _
    // Predicated region
    $region14: #{rnn_forward.1} parent=1 // pred_check
      _
    $region15: #{rnn_forward.1} parent=1 // pred_check_branch
      %26 = sbr.rel (0) target = $region17
    $region16: #{rnn_forward.1} parent=1 // pred_region
      %27 = dma.done [#allocation3], 2048
    $region17: #{rnn_forward.1} parent=1 // pred_fallthru
      _
    %v28 = vld [vmem:[%s1] sm:$0xff]
    %v29 = vld [vmem:[%s1 + $0x8] sm:$0x1]
    %v30 = vld [vmem:[%s1 + $0x9] sm:$0x1]
    %v31 = vld [vmem:[%s1 + $0xa] sm:$0x1]
    %v32 = vld [vmem:[%s0] sm:$0xff]
    %v33 = vld [vmem:[%s0 + $0x8] sm:$0xff]
    %v34 = vld [vmem:[%s0 + $0x10] sm:$0xff]
    %v35 = vld [vmem:[%s0 + $0x18] sm:$0xff]
    %v36 = vld [vmem:[%s0 + $0x20] sm:$0xff]
    %v37 = vld [vmem:[%s0 + $0x28] sm:$0xff]
    %v38 = vld [vmem:[%s0 + $0x30] sm:$0xff]
    %v39 = vld [vmem:[%s0 + $0x38] sm:$0xff]
    %v40 = vlaneseq
    %v41 = vshrl.u32 %v40, 7
    %v42 = vsub.s32 0, %v41
    %v43 = vrot.slane %v29, %v42
    %vm44 = vcmask 64512
    %v46 = vsel %vm44, %v32, 0
    %v49 = vsel %vm44, %v33, 0
    %v52 = vsel %vm44, %v34, 0
    %v55 = vsel %vm44, %v35, 0
    %v58 = vsel %vm44, %v36, 0
    %v61 = vsel %vm44, %v37, 0
    %v64 = vsel %vm44, %v38, 0
    %v67 = vsel %vm44, %v39, 0
    %69 = vmatprep.subr.mxu0 0.0
    %70 = vmatpush1.msra.mxu0 0.0
    %71 = vmatprep.subr.mxu0 0.0
    %72 = vmatpush1.msra.mxu0 0.0
    %73 = vmatprep.subr.mxu0 0.0
    %74 = vmatpush1.msra.mxu0 0.0
    %75 = vmatprep.subr.mxu0 0.0
    %76 = vmatpush1.msra.mxu0 0.0
    %77 = vmatprep.subr.mxu0 0.0
    %78 = vmatpush1.msra.mxu0 0.0
    %79 = vmatprep.subr.mxu0 0.0
    %80 = vmatpush1.msra.mxu0 0.0
    %81 = vmatprep.subr.mxu0 0.0
    %82 = vmatpush1.msra.mxu0 0.0
    %83 = vmatprep.subr.mxu0 0.0
    %84 = vmatpush1.msra.mxu0 0.0
    %85 = vmatprep.subr.mxu0 0.0
    %86 = vmatpush1.msra.mxu0 0.0
    %87 = vmatprep.subr.mxu0 0.0
    %88 = vmatpush1.msra.mxu0 0.0
    %89 = vmatprep.subr.mxu0 0.0
    %90 = vmatpush1.msra.mxu0 0.0
    %91 = vmatprep.subr.mxu0 0.0
    %92 = vmatpush1.msra.mxu0 0.0
    %93 = vmatprep.subr.mxu0 0.0
    %94 = vmatpush1.msra.mxu0 0.0
    %95 = vmatprep.subr.mxu0 0.0
    %96 = vmatpush1.msra.mxu0 0.0
    %97 = vmatprep.subr.mxu0 0.0
    %98 = vmatpush1.msra.mxu0 0.0
    %99 = vmatprep.subr.mxu0 0.0
    %100 = vmatpush1.msra.mxu0 %v28
    %101 = vmatprep.subr.mxu0 0.0
    %102 = vmatpush2.msra.mxu0 0.0
    %103 = vmatprep.subr.mxu0 0.0
    %104 = vmatpush2.msra.mxu0 0.0
    %105 = vmatprep.subr.mxu0 0.0
    %106 = vmatpush2.msra.mxu0 0.0
    %107 = vmatprep.subr.mxu0 0.0
    %108 = vmatpush2.msra.mxu0 0.0
    %109 = vmatprep.subr.mxu0 0.0
    %110 = vmatpush2.msra.mxu0 0.0
    %111 = vmatprep.subr.mxu0 0.0
    %112 = vmatpush2.msra.mxu0 0.0
    %113 = vmatprep.subr.mxu0 0.0
    %114 = vmatpush2.msra.mxu0 0.0
    %115 = vmatprep.subr.mxu0 0.0
    %116 = vmatpush2.msra.mxu0 0.0
    %117 = vmatprep.subr.mxu0 0.0
    %118 = vmatpush2.msra.mxu0 0.0
    %119 = vmatprep.subr.mxu0 0.0
    %120 = vmatpush2.msra.mxu0 0.0
    %121 = vmatprep.subr.mxu0 0.0
    %122 = vmatpush2.msra.mxu0 0.0
    %123 = vmatprep.subr.mxu0 0.0
    %124 = vmatpush2.msra.mxu0 0.0
    %125 = vmatprep.subr.mxu0 0.0
    %126 = vmatpush2.msra.mxu0 0.0
    %127 = vmatprep.subr.mxu0 0.0
    %128 = vmatpush2.msra.mxu0 0.0
    %129 = vmatprep.subr.mxu0 0.0
    %130 = vmatpush2.msra.mxu0 0.0
    %131 = vmatprep.subr.mxu0 0.0
    %132 = vmatpush2.msra.mxu0 0.0
    %133 = vmatprep.mubr.f32.mxu0 0.0
    %134 = vmatmul.mubr.f32.gmra.mxu0 %v46
    %v135 = vpop.f32.mrf.mxu0
    %v136 = vadd.f32 %v43, %v135
    %v137 = vpop.f32.mrf.mxu0
    %138 = vmatprep.mubr.f32.mxu0 0.0
    %139 = vmatmul.mubr.f32.gmra.mxu0 %v49
    %v140 = vpop.f32.mrf.mxu0
    %v141 = vadd.f32 %v43, %v140
    %v142 = vpop.f32.mrf.mxu0
    %143 = vmatprep.mubr.f32.mxu0 0.0
    %144 = vmatmul.mubr.f32.gmra.mxu0 %v52
    %v145 = vpop.f32.mrf.mxu0
    %v146 = vadd.f32 %v43, %v145
    %v147 = vpop.f32.mrf.mxu0
    %148 = vmatprep.mubr.f32.mxu0 0.0
    %149 = vmatmul.mubr.f32.gmra.mxu0 %v55
    %v150 = vpop.f32.mrf.mxu0
    %v151 = vadd.f32 %v43, %v150
    %v152 = vpop.f32.mrf.mxu0
    %153 = vmatprep.mubr.f32.mxu0 0.0
    %154 = vmatmul.mubr.f32.gmra.mxu0 %v58
    %v155 = vpop.f32.mrf.mxu0
    %v156 = vadd.f32 %v43, %v155
    %v157 = vpop.f32.mrf.mxu0
    %158 = vmatprep.mubr.f32.mxu0 0.0
    %159 = vmatmul.mubr.f32.gmra.mxu0 %v61
    %v160 = vpop.f32.mrf.mxu0
    %v161 = vadd.f32 %v43, %v160
    %v162 = vpop.f32.mrf.mxu0
    %163 = vmatprep.mubr.f32.mxu0 0.0
    %164 = vmatmul.mubr.f32.gmra.mxu0 %v64
    %v165 = vpop.f32.mrf.mxu0
    %v166 = vadd.f32 %v43, %v165
    %v167 = vpop.f32.mrf.mxu0
    %168 = vmatprep.mubr.f32.mxu0 0.0
    %169 = vmatmul.mubr.f32.gmra.mxu0 %v67
    %v170 = vpop.f32.mrf.mxu0
    %v171 = vadd.f32 %v43, %v170
    %v172 = vpop.f32.mrf.mxu0
    %173 = vdwg.mxu0
    %v174 = vld [vmem:[#allocation2] sm:$0xff]
    %v175 = vld [vmem:[#allocation2 + $0x8] sm:$0xff]
    %v176 = vld [vmem:[#allocation2 + $0x10] sm:$0xff]
    %v177 = vld [vmem:[#allocation2 + $0x18] sm:$0xff]
    %v178 = vld [vmem:[#allocation2 + $0x20] sm:$0xff]
    %v179 = vld [vmem:[#allocation2 + $0x28] sm:$0xff]
    %v180 = vld [vmem:[#allocation2 + $0x30] sm:$0xff]
    %v181 = vld [vmem:[#allocation2 + $0x38] sm:$0xff]
    %v182 = vld [vmem:[#allocation2 + $0x40] sm:$0xff]
    %v183 = vld [vmem:[#allocation2 + $0x48] sm:$0xff]
    %v184 = vld [vmem:[#allocation2 + $0x50] sm:$0xff]
    %v185 = vld [vmem:[#allocation2 + $0x58] sm:$0xff]
    %v186 = vld [vmem:[#allocation2 + $0x60] sm:$0xff]
    %v187 = vld [vmem:[#allocation2 + $0x68] sm:$0xff]
    %v188 = vld [vmem:[#allocation2 + $0x70] sm:$0xff]
    %v189 = vld [vmem:[#allocation2 + $0x78] sm:$0xff]
    %v190 = vtanh.pop %v136
    %191 = vmatprep.subr.mxu0 0.0
    %192 = vmatpush1.msra.mxu0 %v189
    %193 = vmatprep.subr.mxu0 0.0
    %194 = vmatpush1.msra.mxu0 %v188
    %195 = vmatprep.subr.mxu0 0.0
    %196 = vmatpush1.msra.mxu0 %v187
    %197 = vmatprep.subr.mxu0 0.0
    %198 = vmatpush1.msra.mxu0 %v186
    %199 = vmatprep.subr.mxu0 0.0
    %200 = vmatpush1.msra.mxu0 %v185
    %201 = vmatprep.subr.mxu0 0.0
    %202 = vmatpush1.msra.mxu0 %v184
    %203 = vmatprep.subr.mxu0 0.0
    %204 = vmatpush1.msra.mxu0 %v183
    %205 = vmatprep.subr.mxu0 0.0
    %206 = vmatpush1.msra.mxu0 %v182
    %207 = vmatprep.subr.mxu0 0.0
    %208 = vmatpush1.msra.mxu0 %v181
    %209 = vmatprep.subr.mxu0 0.0
    %210 = vmatpush1.msra.mxu0 %v180
    %211 = vmatprep.subr.mxu0 0.0
    %212 = vmatpush1.msra.mxu0 %v179
    %213 = vmatprep.subr.mxu0 0.0
    %214 = vmatpush1.msra.mxu0 %v178
    %215 = vmatprep.subr.mxu0 0.0
    %216 = vmatpush1.msra.mxu0 %v177
    %217 = vmatprep.subr.mxu0 0.0
    %218 = vmatpush1.msra.mxu0 %v176
    %219 = vmatprep.subr.mxu0 0.0
    %220 = vmatpush1.msra.mxu0 %v175
    %221 = vmatprep.subr.mxu0 0.0
    %222 = vmatpush1.msra.mxu0 %v174
    %223 = vmatprep.subr.mxu0 0.0
    %224 = vmatpush2.msra.mxu0 0.0
    %225 = vmatprep.subr.mxu0 0.0
    %226 = vmatpush2.msra.mxu0 0.0
    %227 = vmatprep.subr.mxu0 0.0
    %228 = vmatpush2.msra.mxu0 0.0
    %229 = vmatprep.subr.mxu0 0.0
    %230 = vmatpush2.msra.mxu0 0.0
    %231 = vmatprep.subr.mxu0 0.0
    %232 = vmatpush2.msra.mxu0 0.0
    %233 = vmatprep.subr.mxu0 0.0
    %234 = vmatpush2.msra.mxu0 0.0
    %235 = vmatprep.subr.mxu0 0.0
    %236 = vmatpush2.msra.mxu0 0.0
    %237 = vmatprep.subr.mxu0 0.0
    %238 = vmatpush2.msra.mxu0 0.0
    %239 = vmatprep.subr.mxu0 0.0
    %240 = vmatpush2.msra.mxu0 0.0
    %241 = vmatprep.subr.mxu0 0.0
    %242 = vmatpush2.msra.mxu0 0.0
    %243 = vmatprep.subr.mxu0 0.0
    %244 = vmatpush2.msra.mxu0 0.0
    %245 = vmatprep.subr.mxu0 0.0
    %246 = vmatpush2.msra.mxu0 0.0
    %247 = vmatprep.subr.mxu0 0.0
    %248 = vmatpush2.msra.mxu0 0.0
    %249 = vmatprep.subr.mxu0 0.0
    %250 = vmatpush2.msra.mxu0 0.0
    %251 = vmatprep.subr.mxu0 0.0
    %252 = vmatpush2.msra.mxu0 0.0
    %253 = vmatprep.subr.mxu0 0.0
    %254 = vmatpush2.msra.mxu0 0.0
    %255 = vmatprep.mubr.f32.mxu0 0.0
    %256 = vmatmul.mubr.f32.gmra.mxu0 %v190
    %v257 = vpop.f32.mrf.mxu0
    %v258 = vadd.f32 0.0, %v257
    %v259 = vpop.f32.mrf.mxu0
    %260 = vdwg.mxu0
    %v261 = vadd.f32 %v141, %v258
    %v262 = vtanh.pop %v261
    %263 = vmatprep.subr.mxu0 0.0
    %264 = vmatpush1.msra.mxu0 %v189
    %265 = vmatprep.subr.mxu0 0.0
    %266 = vmatpush1.msra.mxu0 %v188
    %267 = vmatprep.subr.mxu0 0.0
    %268 = vmatpush1.msra.mxu0 %v187
    %269 = vmatprep.subr.mxu0 0.0
    %270 = vmatpush1.msra.mxu0 %v186
    %271 = vmatprep.subr.mxu0 0.0
    %272 = vmatpush1.msra.mxu0 %v185
    %273 = vmatprep.subr.mxu0 0.0
    %274 = vmatpush1.msra.mxu0 %v184
    %275 = vmatprep.subr.mxu0 0.0
    %276 = vmatpush1.msra.mxu0 %v183
    %277 = vmatprep.subr.mxu0 0.0
    %278 = vmatpush1.msra.mxu0 %v182
    %279 = vmatprep.subr.mxu0 0.0
    %280 = vmatpush1.msra.mxu0 %v181
    %281 = vmatprep.subr.mxu0 0.0
    %282 = vmatpush1.msra.mxu0 %v180
    %283 = vmatprep.subr.mxu0 0.0
    %284 = vmatpush1.msra.mxu0 %v179
    %285 = vmatprep.subr.mxu0 0.0
    %286 = vmatpush1.msra.mxu0 %v178
    %287 = vmatprep.subr.mxu0 0.0
    %288 = vmatpush1.msra.mxu0 %v177
    %289 = vmatprep.subr.mxu0 0.0
    %290 = vmatpush1.msra.mxu0 %v176
    %291 = vmatprep.subr.mxu0 0.0
    %292 = vmatpush1.msra.mxu0 %v175
    %293 = vmatprep.subr.mxu0 0.0
    %294 = vmatpush1.msra.mxu0 %v174
    %295 = vmatprep.subr.mxu0 0.0
    %296 = vmatpush2.msra.mxu0 0.0
    %297 = vmatprep.subr.mxu0 0.0
    %298 = vmatpush2.msra.mxu0 0.0
    %299 = vmatprep.subr.mxu0 0.0
    %300 = vmatpush2.msra.mxu0 0.0
    %301 = vmatprep.subr.mxu0 0.0
    %302 = vmatpush2.msra.mxu0 0.0
    %303 = vmatprep.subr.mxu0 0.0
    %304 = vmatpush2.msra.mxu0 0.0
    %305 = vmatprep.subr.mxu0 0.0
    %306 = vmatpush2.msra.mxu0 0.0
    %307 = vmatprep.subr.mxu0 0.0
    %308 = vmatpush2.msra.mxu0 0.0
    %309 = vmatprep.subr.mxu0 0.0
    %310 = vmatpush2.msra.mxu0 0.0
    %311 = vmatprep.subr.mxu0 0.0
    %312 = vmatpush2.msra.mxu0 0.0
    %313 = vmatprep.subr.mxu0 0.0
    %314 = vmatpush2.msra.mxu0 0.0
    %315 = vmatprep.subr.mxu0 0.0
    %316 = vmatpush2.msra.mxu0 0.0
    %317 = vmatprep.subr.mxu0 0.0
    %318 = vmatpush2.msra.mxu0 0.0
    %319 = vmatprep.subr.mxu0 0.0
    %320 = vmatpush2.msra.mxu0 0.0
    %321 = vmatprep.subr.mxu0 0.0
    %322 = vmatpush2.msra.mxu0 0.0
    %323 = vmatprep.subr.mxu0 0.0
    %324 = vmatpush2.msra.mxu0 0.0
    %325 = vmatprep.subr.mxu0 0.0
    %326 = vmatpush2.msra.mxu0 0.0
    %327 = vmatprep.mubr.f32.mxu0 0.0
    %328 = vmatmul.mubr.f32.gmra.mxu0 %v262
    %v329 = vpop.f32.mrf.mxu0
    %v330 = vadd.f32 0.0, %v329
    %v331 = vpop.f32.mrf.mxu0
    %332 = vdwg.mxu0
    %v333 = vadd.f32 %v146, %v330
    %v334 = vtanh.pop %v333
    %335 = vmatprep.subr.mxu0 0.0
    %336 = vmatpush1.msra.mxu0 %v189
    %337 = vmatprep.subr.mxu0 0.0
    %338 = vmatpush1.msra.mxu0 %v188
    %339 = vmatprep.subr.mxu0 0.0
    %340 = vmatpush1.msra.mxu0 %v187
    %341 = vmatprep.subr.mxu0 0.0
    %342 = vmatpush1.msra.mxu0 %v186
    %343 = vmatprep.subr.mxu0 0.0
    %344 = vmatpush1.msra.mxu0 %v185
    %345 = vmatprep.subr.mxu0 0.0
    %346 = vmatpush1.msra.mxu0 %v184
    %347 = vmatprep.subr.mxu0 0.0
    %348 = vmatpush1.msra.mxu0 %v183
    %349 = vmatprep.subr.mxu0 0.0
    %350 = vmatpush1.msra.mxu0 %v182
    %351 = vmatprep.subr.mxu0 0.0
    %352 = vmatpush1.msra.mxu0 %v181
    %353 = vmatprep.subr.mxu0 0.0
    %354 = vmatpush1.msra.mxu0 %v180
    %355 = vmatprep.subr.mxu0 0.0
    %356 = vmatpush1.msra.mxu0 %v179
    %357 = vmatprep.subr.mxu0 0.0
    %358 = vmatpush1.msra.mxu0 %v178
    %359 = vmatprep.subr.mxu0 0.0
    %360 = vmatpush1.msra.mxu0 %v177
    %361 = vmatprep.subr.mxu0 0.0
    %362 = vmatpush1.msra.mxu0 %v176
    %363 = vmatprep.subr.mxu0 0.0
    %364 = vmatpush1.msra.mxu0 %v175
    %365 = vmatprep.subr.mxu0 0.0
    %366 = vmatpush1.msra.mxu0 %v174
    %367 = vmatprep.subr.mxu0 0.0
    %368 = vmatpush2.msra.mxu0 0.0
    %369 = vmatprep.subr.mxu0 0.0
    %370 = vmatpush2.msra.mxu0 0.0
    %371 = vmatprep.subr.mxu0 0.0
    %372 = vmatpush2.msra.mxu0 0.0
    %373 = vmatprep.subr.mxu0 0.0
    %374 = vmatpush2.msra.mxu0 0.0
    %375 = vmatprep.subr.mxu0 0.0
    %376 = vmatpush2.msra.mxu0 0.0
    %377 = vmatprep.subr.mxu0 0.0
    %378 = vmatpush2.msra.mxu0 0.0
    %379 = vmatprep.subr.mxu0 0.0
    %380 = vmatpush2.msra.mxu0 0.0
    %381 = vmatprep.subr.mxu0 0.0
    %382 = vmatpush2.msra.mxu0 0.0
    %383 = vmatprep.subr.mxu0 0.0
    %384 = vmatpush2.msra.mxu0 0.0
    %385 = vmatprep.subr.mxu0 0.0
    %386 = vmatpush2.msra.mxu0 0.0
    %387 = vmatprep.subr.mxu0 0.0
    %388 = vmatpush2.msra.mxu0 0.0
    %389 = vmatprep.subr.mxu0 0.0
    %390 = vmatpush2.msra.mxu0 0.0
    %391 = vmatprep.subr.mxu0 0.0
    %392 = vmatpush2.msra.mxu0 0.0
    %393 = vmatprep.subr.mxu0 0.0
    %394 = vmatpush2.msra.mxu0 0.0
    %395 = vmatprep.subr.mxu0 0.0
    %396 = vmatpush2.msra.mxu0 0.0
    %397 = vmatprep.subr.mxu0 0.0
    %398 = vmatpush2.msra.mxu0 0.0
    %399 = vmatprep.mubr.f32.mxu0 0.0
    %400 = vmatmul.mubr.f32.gmra.mxu0 %v334
    %v401 = vpop.f32.mrf.mxu0
    %v402 = vadd.f32 0.0, %v401
    %v403 = vpop.f32.mrf.mxu0
    %404 = vdwg.mxu0
    %v405 = vadd.f32 %v151, %v402
    %v406 = vtanh.pop %v405
    %407 = vmatprep.subr.mxu0 0.0
    %408 = vmatpush1.msra.mxu0 %v189
    %409 = vmatprep.subr.mxu0 0.0
    %410 = vmatpush1.msra.mxu0 %v188
    %411 = vmatprep.subr.mxu0 0.0
    %412 = vmatpush1.msra.mxu0 %v187
    %413 = vmatprep.subr.mxu0 0.0
    %414 = vmatpush1.msra.mxu0 %v186
    %415 = vmatprep.subr.mxu0 0.0
    %416 = vmatpush1.msra.mxu0 %v185
    %417 = vmatprep.subr.mxu0 0.0
    %418 = vmatpush1.msra.mxu0 %v184
    %419 = vmatprep.subr.mxu0 0.0
    %420 = vmatpush1.msra.mxu0 %v183
    %421 = vmatprep.subr.mxu0 0.0
    %422 = vmatpush1.msra.mxu0 %v182
    %423 = vmatprep.subr.mxu0 0.0
    %424 = vmatpush1.msra.mxu0 %v181
    %425 = vmatprep.subr.mxu0 0.0
    %426 = vmatpush1.msra.mxu0 %v180
    %427 = vmatprep.subr.mxu0 0.0
    %428 = vmatpush1.msra.mxu0 %v179
    %429 = vmatprep.subr.mxu0 0.0
    %430 = vmatpush1.msra.mxu0 %v178
    %431 = vmatprep.subr.mxu0 0.0
    %432 = vmatpush1.msra.mxu0 %v177
    %433 = vmatprep.subr.mxu0 0.0
    %434 = vmatpush1.msra.mxu0 %v176
    %435 = vmatprep.subr.mxu0 0.0
    %436 = vmatpush1.msra.mxu0 %v175
    %437 = vmatprep.subr.mxu0 0.0
    %438 = vmatpush1.msra.mxu0 %v174
    %439 = vmatprep.subr.mxu0 0.0
    %440 = vmatpush2.msra.mxu0 0.0
    %441 = vmatprep.subr.mxu0 0.0
    %442 = vmatpush2.msra.mxu0 0.0
    %443 = vmatprep.subr.mxu0 0.0
    %444 = vmatpush2.msra.mxu0 0.0
    %445 = vmatprep.subr.mxu0 0.0
    %446 = vmatpush2.msra.mxu0 0.0
    %447 = vmatprep.subr.mxu0 0.0
    %448 = vmatpush2.msra.mxu0 0.0
    %449 = vmatprep.subr.mxu0 0.0
    %450 = vmatpush2.msra.mxu0 0.0
    %451 = vmatprep.subr.mxu0 0.0
    %452 = vmatpush2.msra.mxu0 0.0
    %453 = vmatprep.subr.mxu0 0.0
    %454 = vmatpush2.msra.mxu0 0.0
    %455 = vmatprep.subr.mxu0 0.0
    %456 = vmatpush2.msra.mxu0 0.0
    %457 = vmatprep.subr.mxu0 0.0
    %458 = vmatpush2.msra.mxu0 0.0
    %459 = vmatprep.subr.mxu0 0.0
    %460 = vmatpush2.msra.mxu0 0.0
    %461 = vmatprep.subr.mxu0 0.0
    %462 = vmatpush2.msra.mxu0 0.0
    %463 = vmatprep.subr.mxu0 0.0
    %464 = vmatpush2.msra.mxu0 0.0
    %465 = vmatprep.subr.mxu0 0.0
    %466 = vmatpush2.msra.mxu0 0.0
    %467 = vmatprep.subr.mxu0 0.0
    %468 = vmatpush2.msra.mxu0 0.0
    %469 = vmatprep.subr.mxu0 0.0
    %470 = vmatpush2.msra.mxu0 0.0
    %471 = vmatprep.mubr.f32.mxu0 0.0
    %472 = vmatmul.mubr.f32.gmra.mxu0 %v406
    %v473 = vpop.f32.mrf.mxu0
    %v474 = vadd.f32 0.0, %v473
    %v475 = vpop.f32.mrf.mxu0
    %476 = vdwg.mxu0
    %v477 = vadd.f32 %v156, %v474
    %v478 = vtanh.pop %v477
    %479 = vmatprep.subr.mxu0 0.0
    %480 = vmatpush1.msra.mxu0 %v189
    %481 = vmatprep.subr.mxu0 0.0
    %482 = vmatpush1.msra.mxu0 %v188
    %483 = vmatprep.subr.mxu0 0.0
    %484 = vmatpush1.msra.mxu0 %v187
    %485 = vmatprep.subr.mxu0 0.0
    %486 = vmatpush1.msra.mxu0 %v186
    %487 = vmatprep.subr.mxu0 0.0
    %488 = vmatpush1.msra.mxu0 %v185
    %489 = vmatprep.subr.mxu0 0.0
    %490 = vmatpush1.msra.mxu0 %v184
    %491 = vmatprep.subr.mxu0 0.0
    %492 = vmatpush1.msra.mxu0 %v183
    %493 = vmatprep.subr.mxu0 0.0
    %494 = vmatpush1.msra.mxu0 %v182
    %495 = vmatprep.subr.mxu0 0.0
    %496 = vmatpush1.msra.mxu0 %v181
    %497 = vmatprep.subr.mxu0 0.0
    %498 = vmatpush1.msra.mxu0 %v180
    %499 = vmatprep.subr.mxu0 0.0
    %500 = vmatpush1.msra.mxu0 %v179
    %501 = vmatprep.subr.mxu0 0.0
    %502 = vmatpush1.msra.mxu0 %v178
    %503 = vmatprep.subr.mxu0 0.0
    %504 = vmatpush1.msra.mxu0 %v177
    %505 = vmatprep.subr.mxu0 0.0
    %506 = vmatpush1.msra.mxu0 %v176
    %507 = vmatprep.subr.mxu0 0.0
    %508 = vmatpush1.msra.mxu0 %v175
    %509 = vmatprep.subr.mxu0 0.0
    %510 = vmatpush1.msra.mxu0 %v174
    %511 = vmatprep.subr.mxu0 0.0
    %512 = vmatpush2.msra.mxu0 0.0
    %513 = vmatprep.subr.mxu0 0.0
    %514 = vmatpush2.msra.mxu0 0.0
    %515 = vmatprep.subr.mxu0 0.0
    %516 = vmatpush2.msra.mxu0 0.0
    %517 = vmatprep.subr.mxu0 0.0
    %518 = vmatpush2.msra.mxu0 0.0
    %519 = vmatprep.subr.mxu0 0.0
    %520 = vmatpush2.msra.mxu0 0.0
    %521 = vmatprep.subr.mxu0 0.0
    %522 = vmatpush2.msra.mxu0 0.0
    %523 = vmatprep.subr.mxu0 0.0
    %524 = vmatpush2.msra.mxu0 0.0
    %525 = vmatprep.subr.mxu0 0.0
    %526 = vmatpush2.msra.mxu0 0.0
    %527 = vmatprep.subr.mxu0 0.0
    %528 = vmatpush2.msra.mxu0 0.0
    %529 = vmatprep.subr.mxu0 0.0
    %530 = vmatpush2.msra.mxu0 0.0
    %531 = vmatprep.subr.mxu0 0.0
    %532 = vmatpush2.msra.mxu0 0.0
    %533 = vmatprep.subr.mxu0 0.0
    %534 = vmatpush2.msra.mxu0 0.0
    %535 = vmatprep.subr.mxu0 0.0
    %536 = vmatpush2.msra.mxu0 0.0
    %537 = vmatprep.subr.mxu0 0.0
    %538 = vmatpush2.msra.mxu0 0.0
    %539 = vmatprep.subr.mxu0 0.0
    %540 = vmatpush2.msra.mxu0 0.0
    %541 = vmatprep.subr.mxu0 0.0
    %542 = vmatpush2.msra.mxu0 0.0
    %543 = vmatprep.mubr.f32.mxu0 0.0
    %544 = vmatmul.mubr.f32.gmra.mxu0 %v478
    %v545 = vpop.f32.mrf.mxu0
    %v546 = vadd.f32 0.0, %v545
    %v547 = vpop.f32.mrf.mxu0
    %548 = vdwg.mxu0
    %v549 = vadd.f32 %v161, %v546
    %v550 = vtanh.pop %v549
    %551 = vmatprep.subr.mxu0 0.0
    %552 = vmatpush1.msra.mxu0 %v189
    %553 = vmatprep.subr.mxu0 0.0
    %554 = vmatpush1.msra.mxu0 %v188
    %555 = vmatprep.subr.mxu0 0.0
    %556 = vmatpush1.msra.mxu0 %v187
    %557 = vmatprep.subr.mxu0 0.0
    %558 = vmatpush1.msra.mxu0 %v186
    %559 = vmatprep.subr.mxu0 0.0
    %560 = vmatpush1.msra.mxu0 %v185
    %561 = vmatprep.subr.mxu0 0.0
    %562 = vmatpush1.msra.mxu0 %v184
    %563 = vmatprep.subr.mxu0 0.0
    %564 = vmatpush1.msra.mxu0 %v183
    %565 = vmatprep.subr.mxu0 0.0
    %566 = vmatpush1.msra.mxu0 %v182
    %567 = vmatprep.subr.mxu0 0.0
    %568 = vmatpush1.msra.mxu0 %v181
    %569 = vmatprep.subr.mxu0 0.0
    %570 = vmatpush1.msra.mxu0 %v180
    %571 = vmatprep.subr.mxu0 0.0
    %572 = vmatpush1.msra.mxu0 %v179
    %573 = vmatprep.subr.mxu0 0.0
    %574 = vmatpush1.msra.mxu0 %v178
    %575 = vmatprep.subr.mxu0 0.0
    %576 = vmatpush1.msra.mxu0 %v177
    %577 = vmatprep.subr.mxu0 0.0
    %578 = vmatpush1.msra.mxu0 %v176
    %579 = vmatprep.subr.mxu0 0.0
    %580 = vmatpush1.msra.mxu0 %v175
    %581 = vmatprep.subr.mxu0 0.0
    %582 = vmatpush1.msra.mxu0 %v174
    %583 = vmatprep.subr.mxu0 0.0
    %584 = vmatpush2.msra.mxu0 0.0
    %585 = vmatprep.subr.mxu0 0.0
    %586 = vmatpush2.msra.mxu0 0.0
    %587 = vmatprep.subr.mxu0 0.0
    %588 = vmatpush2.msra.mxu0 0.0
    %589 = vmatprep.subr.mxu0 0.0
    %590 = vmatpush2.msra.mxu0 0.0
    %591 = vmatprep.subr.mxu0 0.0
    %592 = vmatpush2.msra.mxu0 0.0
    %593 = vmatprep.subr.mxu0 0.0
    %594 = vmatpush2.msra.mxu0 0.0
    %595 = vmatprep.subr.mxu0 0.0
    %596 = vmatpush2.msra.mxu0 0.0
    %597 = vmatprep.subr.mxu0 0.0
    %598 = vmatpush2.msra.mxu0 0.0
    %599 = vmatprep.subr.mxu0 0.0
    %600 = vmatpush2.msra.mxu0 0.0
    %601 = vmatprep.subr.mxu0 0.0
    %602 = vmatpush2.msra.mxu0 0.0
    %603 = vmatprep.subr.mxu0 0.0
    %604 = vmatpush2.msra.mxu0 0.0
    %605 = vmatprep.subr.mxu0 0.0
    %606 = vmatpush2.msra.mxu0 0.0
    %607 = vmatprep.subr.mxu0 0.0
    %608 = vmatpush2.msra.mxu0 0.0
    %609 = vmatprep.subr.mxu0 0.0
    %610 = vmatpush2.msra.mxu0 0.0
    %611 = vmatprep.subr.mxu0 0.0
    %612 = vmatpush2.msra.mxu0 0.0
    %613 = vmatprep.subr.mxu0 0.0
    %614 = vmatpush2.msra.mxu0 0.0
    %615 = vmatprep.mubr.f32.mxu0 0.0
    %616 = vmatmul.mubr.f32.gmra.mxu0 %v550
    %v617 = vpop.f32.mrf.mxu0
    %v618 = vadd.f32 0.0, %v617
    %v619 = vpop.f32.mrf.mxu0
    %620 = vdwg.mxu0
    %v621 = vadd.f32 %v166, %v618
    %v622 = vtanh.pop %v621
    %623 = vmatprep.subr.mxu0 0.0
    %624 = vmatpush1.msra.mxu0 %v189
    %625 = vmatprep.subr.mxu0 0.0
    %626 = vmatpush1.msra.mxu0 %v188
    %627 = vmatprep.subr.mxu0 0.0
    %628 = vmatpush1.msra.mxu0 %v187
    %629 = vmatprep.subr.mxu0 0.0
    %630 = vmatpush1.msra.mxu0 %v186
    %631 = vmatprep.subr.mxu0 0.0
    %632 = vmatpush1.msra.mxu0 %v185
    %633 = vmatprep.subr.mxu0 0.0
    %634 = vmatpush1.msra.mxu0 %v184
    %635 = vmatprep.subr.mxu0 0.0
    %636 = vmatpush1.msra.mxu0 %v183
    %637 = vmatprep.subr.mxu0 0.0
    %638 = vmatpush1.msra.mxu0 %v182
    %639 = vmatprep.subr.mxu0 0.0
    %640 = vmatpush1.msra.mxu0 %v181
    %641 = vmatprep.subr.mxu0 0.0
    %642 = vmatpush1.msra.mxu0 %v180
    %643 = vmatprep.subr.mxu0 0.0
    %644 = vmatpush1.msra.mxu0 %v179
    %645 = vmatprep.subr.mxu0 0.0
    %646 = vmatpush1.msra.mxu0 %v178
    %647 = vmatprep.subr.mxu0 0.0
    %648 = vmatpush1.msra.mxu0 %v177
    %649 = vmatprep.subr.mxu0 0.0
    %650 = vmatpush1.msra.mxu0 %v176
    %651 = vmatprep.subr.mxu0 0.0
    %652 = vmatpush1.msra.mxu0 %v175
    %653 = vmatprep.subr.mxu0 0.0
    %654 = vmatpush1.msra.mxu0 %v174
    %655 = vmatprep.subr.mxu0 0.0
    %656 = vmatpush2.msra.mxu0 0.0
    %657 = vmatprep.subr.mxu0 0.0
    %658 = vmatpush2.msra.mxu0 0.0
    %659 = vmatprep.subr.mxu0 0.0
    %660 = vmatpush2.msra.mxu0 0.0
    %661 = vmatprep.subr.mxu0 0.0
    %662 = vmatpush2.msra.mxu0 0.0
    %663 = vmatprep.subr.mxu0 0.0
    %664 = vmatpush2.msra.mxu0 0.0
    %665 = vmatprep.subr.mxu0 0.0
    %666 = vmatpush2.msra.mxu0 0.0
    %667 = vmatprep.subr.mxu0 0.0
    %668 = vmatpush2.msra.mxu0 0.0
    %669 = vmatprep.subr.mxu0 0.0
    %670 = vmatpush2.msra.mxu0 0.0
    %671 = vmatprep.subr.mxu0 0.0
    %672 = vmatpush2.msra.mxu0 0.0
    %673 = vmatprep.subr.mxu0 0.0
    %674 = vmatpush2.msra.mxu0 0.0
    %675 = vmatprep.subr.mxu0 0.0
    %676 = vmatpush2.msra.mxu0 0.0
    %677 = vmatprep.subr.mxu0 0.0
    %678 = vmatpush2.msra.mxu0 0.0
    %679 = vmatprep.subr.mxu0 0.0
    %680 = vmatpush2.msra.mxu0 0.0
    %681 = vmatprep.subr.mxu0 0.0
    %682 = vmatpush2.msra.mxu0 0.0
    %683 = vmatprep.subr.mxu0 0.0
    %684 = vmatpush2.msra.mxu0 0.0
    %685 = vmatprep.subr.mxu0 0.0
    %686 = vmatpush2.msra.mxu0 0.0
    %687 = vmatprep.mubr.f32.mxu0 0.0
    %688 = vmatmul.mubr.f32.gmra.mxu0 %v622
    %v689 = vpop.f32.mrf.mxu0
    %v690 = vadd.f32 0.0, %v689
    %v691 = vpop.f32.mrf.mxu0
    %692 = vdwg.mxu0
    %v693 = vadd.f32 %v171, %v690
    %v694 = vtanh.pop %v693
    %v695 = vlaneseq
    %v696 = vshrl.u32 %v695, 7
    %v697 = vsub.s32 0, %v696
    %v698 = vrot.slane %v30, %v697
    %v699 = vmul.f32 %v694, %v698
    %700 = vadd.xlane.f32.xlu0 %v699
    %v701 = vpop.xlane.xlu0 %700
    %v702 = vlaneseq
    %v703 = vshrl.u32 %v702, 7
    %v704 = vsub.s32 0, %v703
    %v705 = vrot.slane %v31, %v704
    %v706 = vadd.f32 %v701, %v705
    %vm707 = vcmask 7168
    %708 = vst.msk [vmem:[%s3] sm:$0xff] %vm707, %v706
    // Predicated region
    $region18: #{rnn_forward.1} parent=1 // pred_check
      _
    $region19: #{rnn_forward.1} parent=1 // pred_check_branch
      %710 = sbr.rel (0) target = $region21
    $region20: #{rnn_forward.1} parent=1 // pred_region
      _
    $region21: #{rnn_forward.1} parent=1 // pred_fallthru
      _
    // Predicated region
    $region22: #{rnn_forward.1} parent=1 // pred_check
      _
    $region23: #{rnn_forward.1} parent=1 // pred_check_branch
      %712 = sbr.rel (0) target = $region25
    $region24: #{rnn_forward.1} parent=1 // pred_region
      _
    $region25: #{rnn_forward.1} parent=1 // pred_fallthru
      _
    %713 = vsyncpa [#allocation3], 1

</llo_original>
